<compile_context>
chip_gen: v7x
topology: tpu7x:2x2x1
jax: 0.10.0
libtpu: 0.0.40
codegen_flags: <defaults>
</compile_context>

<pallas_src>
import jax
import jax.numpy as jnp
from jax.experimental import pallas as pl
from jax.experimental.pallas import tpu as pltpu

MODEL_DIM = 32
NUM_CLASSES = 7
SELF_DISTILL_NUM = 6          # concat classifier input = MODEL_DIM * SELF_DISTILL_NUM
BATCH = 2
SEQ = 8
OUT_PAD = 128                 # lane-dense padded output width
MAX_ROW_TILE = 2048           # rows per grid step for large N
MIN_SPLIT_ROWS = 1024         # above this, force >= 2 grid steps (v7x dual-TC sharding)
_ROW_ALIGN = 16               # bf16-friendly sublane alignment


def _round_up(x, m):
    return ((x + m - 1) // m) * m


def _gelu(x):
    # tanh-approx GELU in f32 (tanh -> EUP slot; keep VPU math f32 for v5e).
    c = 0.7978845608028654  # sqrt(2/pi)
    return 0.5 * x * (1.0 + jnp.tanh(c * (x + 0.044715 * x * x * x)))


def _classifier_kernel(t_ref, a_ref, v_ref,
                       w1t, w1a, w1v, b1, w2, b2, w3, b3, w4, b4, o_ref):
    """4-layer MLP classifier on one row tile.

    Layer 1 is three accumulated bf16 dots (folded duplicated concat), so the kernel
    never builds the 6*D-wide row.  All dots are bf16 x bf16 -> f32 accumulation;
    bias adds and GELU are f32; final store casts to bf16 over 128 dense lanes.
    """
    h = (jnp.dot(t_ref[...], w1t[...], preferred_element_type=jnp.float32)
         + jnp.dot(a_ref[...], w1a[...], preferred_element_type=jnp.float32)
         + jnp.dot(v_ref[...], w1v[...], preferred_element_type=jnp.float32)
         + b1[...])
    h = _gelu(h)
    h = jnp.dot(h.astype(jnp.bfloat16), w2[...],
                preferred_element_type=jnp.float32) + b2[...]
    h = _gelu(h)
    h = jnp.dot(h.astype(jnp.bfloat16), w3[...],
                preferred_element_type=jnp.float32) + b3[...]
    h = _gelu(h)
    # Lane-dense bf16 store: w4/b4 are zero-padded to OUT_PAD columns -> full 128-lane
    # unmasked vst at half the writeback bytes of f32.
    o_ref[...] = (jnp.dot(h.astype(jnp.bfloat16), w4[...],
                          preferred_element_type=jnp.float32)
                  + b4[...]).astype(o_ref.dtype)


def adaptive_classifier_pallas(text_rows, audio_rows, visual_rows, params,
                               *, num_classes=NUM_CLASSES,
                               max_row_tile=MAX_ROW_TILE):
    """text/audio/visual rows: (N, D) each -> logits (N, num_classes) in bfloat16.

    Weights/biases are held whole in VMEM (untiled); rows are tiled along the grid.
    """
    n, d = text_rows.shape
    (w1, b1), (w2, b2), (w3, b3), (w4, b4) = params

    # --- fold the duplicated-feature concat (T,T,A,A,V,V) into layer-1 weights,
    #     then cast all matmul weights to bf16 (biases stay f32) ---
    w1t = (w1[0 * d:1 * d] + w1[1 * d:2 * d]).astype(jnp.bfloat16)
    w1a = (w1[2 * d:3 * d] + w1[3 * d:4 * d]).astype(jnp.bfloat16)
    w1v = (w1[4 * d:5 * d] + w1[5 * d:6 * d]).astype(jnp.bfloat16)
    w2b = w2.astype(jnp.bfloat16)
    w3b = w3.astype(jnp.bfloat16)

    # --- lane-dense output: pad final layer to OUT_PAD lanes with zeros ---
    w4p = jnp.zeros((w4.shape[0], OUT_PAD), jnp.bfloat16).at[:, :num_classes].set(
        w4.astype(jnp.bfloat16))
    b4p = jnp.zeros((1, OUT_PAD), jnp.float32).at[:, :num_classes].set(b4)

    # --- bf16 row streams (the dominant HBM traffic) ---
    text_rows = text_rows.astype(jnp.bfloat16)
    audio_rows = audio_rows.astype(jnp.bfloat16)
    visual_rows = visual_rows.astype(jnp.bfloat16)

    # --- row tiling ---
    #   small N  : one grid step (overhead-bound, keep it minimal)
    #   large N  : <= MAX_ROW_TILE rows/step AND at least 2 steps so the "parallel"
    #              row axis can shard across both v7x TensorCores.
    n_al = _round_up(n, _ROW_ALIGN)
    if n_al <= MIN_SPLIT_ROWS:
        row_tile = n_al
    else:
        row_tile = min(max_row_tile, _round_up((n_al + 1) // 2, _ROW_ALIGN))
    n_pad = _round_up(n, row_tile)
    if n_pad != n:
        pad = ((0, n_pad - n), (0, 0))
        text_rows = jnp.pad(text_rows, pad)
        audio_rows = jnp.pad(audio_rows, pad)
        visual_rows = jnp.pad(visual_rows, pad)
        # NOTE: padded rows produce garbage logits (bias+GELU of zeros); they are sliced
        # off below — any future in-kernel reduction over rows must mask them.

    row_spec = pl.BlockSpec((row_tile, d), lambda i: (i, 0))
    # Constants live whole in VMEM: no per-grid-step DMA, no double-buffering.
    const_spec = pl.BlockSpec(memory_space=pltpu.MemorySpace.VMEM)
    grid = (n_pad // row_tile,)

    out = pl.pallas_call(
        _classifier_kernel,
        out_shape=jax.ShapeDtypeStruct((n_pad, OUT_PAD), jnp.bfloat16),
        grid_spec=pltpu.PrefetchScalarGridSpec(
            num_scalar_prefetch=0,
            grid=grid,
            in_specs=[row_spec, row_spec, row_spec] + [const_spec] * 10,
            out_specs=pl.BlockSpec((row_tile, OUT_PAD), lambda i: (i, 0)),
        ),
        compiler_params=pltpu.CompilerParams(dimension_semantics=("parallel",)),
    )(text_rows, audio_rows, visual_rows,
      w1t, w1a, w1v, b1, w2b, b2, w3b, b3, w4p, b4p)

    return out[:n, :num_classes]


def _linear_params(key, fan_in, fan_out):
    # Deterministic init mirroring torch.nn.Linear default (uniform +- 1/sqrt(fan_in)).
    kw, kb = jax.random.split(key)
    bound = 1.0 / (fan_in ** 0.5)
    w = jax.random.uniform(kw, (fan_in, fan_out), jnp.float32, -bound, bound)
    b = jax.random.uniform(kb, (1, fan_out), jnp.float32, -bound, bound)
    return w, b


def init_classifier_params(key, model_dim=MODEL_DIM, num_classes=NUM_CLASSES,
                           sd_num=SELF_DISTILL_NUM):
    # layer_config from _init_dynamic_adaptive_fusion_classifier
    layer_config = [
        (model_dim * sd_num, model_dim * 3),
        (model_dim * 3, model_dim),
        (model_dim, model_dim // 2),
        (model_dim // 2, num_classes),
    ]
    keys = jax.random.split(key, len(layer_config))
    return tuple(_linear_params(k, fi, fo) for k, (fi, fo) in zip(keys, layer_config))


def main_task_forward(text_features, audio_features, visual_features, classifier_params):
    """Reproduces MainTaskModule.forward for the configuration documented above.

    Inputs: (B, S, MODEL_DIM) each. Returns (logits_DAF, None, None, None, None, None, None).

    The dual-modality passthrough + fusion concat + final concat mathematically yield
    final_features = concat(T, T, A, A, V, V); instead of materializing that 6x-wide
    tensor in HBM, the duplication is folded into the classifier's layer-1 weights and
    T/A/V rows are fed directly into the Pallas kernel.
    """
    b, s, d = text_features.shape
    flat = lambda x: x.reshape(b * s, d)
    logits_daf = adaptive_classifier_pallas(
        flat(text_features), flat(audio_features), flat(visual_features),
        classifier_params)
    return (logits_daf, None, None, None, None, None, None)


def _reference_classifier(x, params):
    # Pure-JAX reference using the ORIGINAL (unfolded) weights on the explicitly
    # concatenated final_features.  Emulates the kernel's mixed precision (bf16 dot
    # operands, f32 accumulation / bias / GELU) so the fold + bf16 cast are validated.
    (w1, b1), (w2, b2), (w3, b3), (w4, b4) = params
    bf = jnp.bfloat16
    h = _gelu(jnp.dot(x.astype(bf), w1.astype(bf),
                      preferred_element_type=jnp.float32) + b1)
    h = _gelu(jnp.dot(h.astype(bf), w2.astype(bf),
                      preferred_element_type=jnp.float32) + b2)
    h = _gelu(jnp.dot(h.astype(bf), w3.astype(bf),
                      preferred_element_type=jnp.float32) + b3)
    return jnp.dot(h.astype(bf), w4.astype(bf),
                   preferred_element_type=jnp.float32) + b4


if __name__ == "__main__":
    key = jax.random.PRNGKey(0)
    k_t, k_a, k_v, k_p = jax.random.split(key, 4)

    text_features = jax.random.normal(k_t, (BATCH, SEQ, MODEL_DIM), jnp.float32)
    audio_features = jax.random.normal(k_a, (BATCH, SEQ, MODEL_DIM), jnp.float32)
    visual_features = jax.random.normal(k_v, (BATCH, SEQ, MODEL_DIM), jnp.float32)

    classifier_params = init_classifier_params(k_p)

    fwd = jax.jit(main_task_forward)
    outputs = fwd(text_features, audio_features, visual_features, classifier_params)
    logits = jax.block_until_ready(outputs[0])
    assert logits.shape == (BATCH * SEQ, NUM_CLASSES)
    assert logits.dtype == jnp.bfloat16

    # silent correctness check against a pure-JAX reference following the module's
    # explicit concat path (validates the folded-W1 formulation and bf16 operand cast).
    final = jnp.concatenate(
        (text_features, text_features, audio_features, audio_features,
         visual_features, visual_features), axis=-1).reshape(-1, 6 * MODEL_DIM)
    ref = _reference_classifier(final, classifier_params)
    if not jnp.allclose(logits.astype(jnp.float32), ref, atol=5e-2, rtol=5e-2):
        raise AssertionError("Pallas classifier mismatch vs reference")

    print("KERNEL_OK")
</pallas_src>

<mosaic_0001>
module attributes {stable_mosaic.version = 11 : i64} {
  func.func @_classifier_kernel(%arg0: i32, %arg1: memref<16x32xbf16, #tpu.memory_space<vmem>>, %arg2: memref<16x32xbf16, #tpu.memory_space<vmem>>, %arg3: memref<16x32xbf16, #tpu.memory_space<vmem>>, %arg4: memref<32x96xbf16, #tpu.memory_space<vmem>>, %arg5: memref<32x96xbf16, #tpu.memory_space<vmem>>, %arg6: memref<32x96xbf16, #tpu.memory_space<vmem>>, %arg7: memref<1x96xf32, #tpu.memory_space<vmem>>, %arg8: memref<96x32xbf16, #tpu.memory_space<vmem>>, %arg9: memref<1x32xf32, #tpu.memory_space<vmem>>, %arg10: memref<32x16xbf16, #tpu.memory_space<vmem>>, %arg11: memref<1x16xf32, #tpu.memory_space<vmem>>, %arg12: memref<16x128xbf16, #tpu.memory_space<vmem>>, %arg13: memref<1x128xf32, #tpu.memory_space<vmem>>, %arg14: memref<16x128xbf16, #tpu.memory_space<vmem>>) attributes {dimension_semantics = [#tpu.dimension_semantics<parallel>], iteration_bounds = array<i64: 1>, scalar_prefetch = 0 : i64, scratch_operands = 0 : i64, tpu.core_type = #tpu.core_type<tc>, window_params = [{transform_indices = @transform_0, window_bounds = array<i64: 16, 32>}, {transform_indices = @transform_1, window_bounds = array<i64: 16, 32>}, {transform_indices = @transform_2, window_bounds = array<i64: 16, 32>}, {pipeline_mode = #tpu.pipeline_mode<synchronous>, transform_indices = @transform_3, window_bounds = array<i64: 32, 96>}, {pipeline_mode = #tpu.pipeline_mode<synchronous>, transform_indices = @transform_4, window_bounds = array<i64: 32, 96>}, {pipeline_mode = #tpu.pipeline_mode<synchronous>, transform_indices = @transform_5, window_bounds = array<i64: 32, 96>}, {pipeline_mode = #tpu.pipeline_mode<synchronous>, transform_indices = @transform_6, window_bounds = array<i64: 1, 96>}, {pipeline_mode = #tpu.pipeline_mode<synchronous>, transform_indices = @transform_7, window_bounds = array<i64: 96, 32>}, {pipeline_mode = #tpu.pipeline_mode<synchronous>, transform_indices = @transform_8, window_bounds = array<i64: 1, 32>}, {pipeline_mode = #tpu.pipeline_mode<synchronous>, transform_indices = @transform_9, window_bounds = array<i64: 32, 16>}, {pipeline_mode = #tpu.pipeline_mode<synchronous>, transform_indices = @transform_10, window_bounds = array<i64: 1, 16>}, {pipeline_mode = #tpu.pipeline_mode<synchronous>, transform_indices = @transform_11, window_bounds = array<i64: 16, 128>}, {pipeline_mode = #tpu.pipeline_mode<synchronous>, transform_indices = @transform_12, window_bounds = array<i64: 1, 128>}, {transform_indices = @transform_13, window_bounds = array<i64: 16, 128>}]} {
    %c0 = arith.constant 0 : index
    %c0_0 = arith.constant 0 : index
    %0 = vector.load %arg1[%c0, %c0_0] : memref<16x32xbf16, #tpu.memory_space<vmem>>, vector<16x32xbf16>
    %c0_1 = arith.constant 0 : index
    %c0_2 = arith.constant 0 : index
    %1 = vector.load %arg4[%c0_1, %c0_2] : memref<32x96xbf16, #tpu.memory_space<vmem>>, vector<32x96xbf16>
    %cst = arith.constant dense<0.000000e+00> : vector<16x96xf32>
    %2 = tpu.matmul %0, %1, %cst {dimension_numbers = #tpu.dot_dimension_numbers<[1], [0], [0], [1], [0, 0, 1, 1], [], []>} : vector<16x32xbf16>, vector<32x96xbf16>, vector<16x96xf32> -> vector<16x96xf32>
    %c0_3 = arith.constant 0 : index
    %c0_4 = arith.constant 0 : index
    %3 = vector.load %arg2[%c0_3, %c0_4] : memref<16x32xbf16, #tpu.memory_space<vmem>>, vector<16x32xbf16>
    %c0_5 = arith.constant 0 : index
    %c0_6 = arith.constant 0 : index
    %4 = vector.load %arg5[%c0_5, %c0_6] : memref<32x96xbf16, #tpu.memory_space<vmem>>, vector<32x96xbf16>
    %cst_7 = arith.constant dense<0.000000e+00> : vector<16x96xf32>
    %5 = tpu.matmul %3, %4, %cst_7 {dimension_numbers = #tpu.dot_dimension_numbers<[1], [0], [0], [1], [0, 0, 1, 1], [], []>} : vector<16x32xbf16>, vector<32x96xbf16>, vector<16x96xf32> -> vector<16x96xf32>
    %6 = arith.addf %2, %5 : vector<16x96xf32>
    %c0_8 = arith.constant 0 : index
    %c0_9 = arith.constant 0 : index
    %7 = vector.load %arg3[%c0_8, %c0_9] : memref<16x32xbf16, #tpu.memory_space<vmem>>, vector<16x32xbf16>
    %c0_10 = arith.constant 0 : index
    %c0_11 = arith.constant 0 : index
    %8 = vector.load %arg6[%c0_10, %c0_11] : memref<32x96xbf16, #tpu.memory_space<vmem>>, vector<32x96xbf16>
    %cst_12 = arith.constant dense<0.000000e+00> : vector<16x96xf32>
    %9 = tpu.matmul %7, %8, %cst_12 {dimension_numbers = #tpu.dot_dimension_numbers<[1], [0], [0], [1], [0, 0, 1, 1], [], []>} : vector<16x32xbf16>, vector<32x96xbf16>, vector<16x96xf32> -> vector<16x96xf32>
    %10 = arith.addf %6, %9 : vector<16x96xf32>
    %c0_13 = arith.constant 0 : index
    %c0_14 = arith.constant 0 : index
    %11 = vector.load %arg7[%c0_13, %c0_14] : memref<1x96xf32, #tpu.memory_space<vmem>>, vector<1x96xf32>
    %12 = vector.broadcast %11 : vector<1x96xf32> to vector<16x96xf32>
    %13 = arith.addf %10, %12 : vector<16x96xf32>
    %cst_15 = arith.constant 5.000000e-01 : f32
    %14 = vector.broadcast %cst_15 : f32 to vector<16x96xf32>
    %15 = arith.mulf %14, %13 : vector<16x96xf32>
    %cst_16 = arith.constant 4.471500e-02 : f32
    %16 = vector.broadcast %cst_16 : f32 to vector<16x96xf32>
    %17 = arith.mulf %16, %13 : vector<16x96xf32>
    %18 = arith.mulf %17, %13 : vector<16x96xf32>
    %19 = arith.mulf %18, %13 : vector<16x96xf32>
    %20 = arith.addf %13, %19 : vector<16x96xf32>
    %cst_17 = arith.constant 0.797884583 : f32
    %21 = vector.broadcast %cst_17 : f32 to vector<16x96xf32>
    %22 = arith.mulf %21, %20 : vector<16x96xf32>
    %23 = math.tanh %22 : vector<16x96xf32>
    %cst_18 = arith.constant 1.000000e+00 : f32
    %24 = vector.broadcast %cst_18 : f32 to vector<16x96xf32>
    %25 = arith.addf %24, %23 : vector<16x96xf32>
    %26 = arith.mulf %15, %25 : vector<16x96xf32>
    %27 = arith.truncf %26 : vector<16x96xf32> to vector<16x96xbf16>
    %c0_19 = arith.constant 0 : index
    %c0_20 = arith.constant 0 : index
    %28 = vector.load %arg8[%c0_19, %c0_20] : memref<96x32xbf16, #tpu.memory_space<vmem>>, vector<96x32xbf16>
    %cst_21 = arith.constant dense<0.000000e+00> : vector<16x32xf32>
    %29 = tpu.matmul %27, %28, %cst_21 {dimension_numbers = #tpu.dot_dimension_numbers<[1], [0], [0], [1], [0, 0, 1, 1], [], []>} : vector<16x96xbf16>, vector<96x32xbf16>, vector<16x32xf32> -> vector<16x32xf32>
    %c0_22 = arith.constant 0 : index
    %c0_23 = arith.constant 0 : index
    %30 = vector.load %arg9[%c0_22, %c0_23] : memref<1x32xf32, #tpu.memory_space<vmem>>, vector<1x32xf32>
    %31 = vector.broadcast %30 : vector<1x32xf32> to vector<16x32xf32>
    %32 = arith.addf %29, %31 : vector<16x32xf32>
    %cst_24 = arith.constant 5.000000e-01 : f32
    %33 = vector.broadcast %cst_24 : f32 to vector<16x32xf32>
    %34 = arith.mulf %33, %32 : vector<16x32xf32>
    %cst_25 = arith.constant 4.471500e-02 : f32
    %35 = vector.broadcast %cst_25 : f32 to vector<16x32xf32>
    %36 = arith.mulf %35, %32 : vector<16x32xf32>
    %37 = arith.mulf %36, %32 : vector<16x32xf32>
    %38 = arith.mulf %37, %32 : vector<16x32xf32>
    %39 = arith.addf %32, %38 : vector<16x32xf32>
    %cst_26 = arith.constant 0.797884583 : f32
    %40 = vector.broadcast %cst_26 : f32 to vector<16x32xf32>
    %41 = arith.mulf %40, %39 : vector<16x32xf32>
    %42 = math.tanh %41 : vector<16x32xf32>
    %cst_27 = arith.constant 1.000000e+00 : f32
    %43 = vector.broadcast %cst_27 : f32 to vector<16x32xf32>
    %44 = arith.addf %43, %42 : vector<16x32xf32>
    %45 = arith.mulf %34, %44 : vector<16x32xf32>
    %46 = arith.truncf %45 : vector<16x32xf32> to vector<16x32xbf16>
    %c0_28 = arith.constant 0 : index
    %c0_29 = arith.constant 0 : index
    %47 = vector.load %arg10[%c0_28, %c0_29] : memref<32x16xbf16, #tpu.memory_space<vmem>>, vector<32x16xbf16>
    %cst_30 = arith.constant dense<0.000000e+00> : vector<16x16xf32>
    %48 = tpu.matmul %46, %47, %cst_30 {dimension_numbers = #tpu.dot_dimension_numbers<[1], [0], [0], [1], [0, 0, 1, 1], [], []>} : vector<16x32xbf16>, vector<32x16xbf16>, vector<16x16xf32> -> vector<16x16xf32>
    %c0_31 = arith.constant 0 : index
    %c0_32 = arith.constant 0 : index
    %49 = vector.load %arg11[%c0_31, %c0_32] : memref<1x16xf32, #tpu.memory_space<vmem>>, vector<1x16xf32>
    %50 = vector.broadcast %49 : vector<1x16xf32> to vector<16x16xf32>
    %51 = arith.addf %48, %50 : vector<16x16xf32>
    %cst_33 = arith.constant 5.000000e-01 : f32
    %52 = vector.broadcast %cst_33 : f32 to vector<16x16xf32>
    %53 = arith.mulf %52, %51 : vector<16x16xf32>
    %cst_34 = arith.constant 4.471500e-02 : f32
    %54 = vector.broadcast %cst_34 : f32 to vector<16x16xf32>
    %55 = arith.mulf %54, %51 : vector<16x16xf32>
    %56 = arith.mulf %55, %51 : vector<16x16xf32>
    %57 = arith.mulf %56, %51 : vector<16x16xf32>
    %58 = arith.addf %51, %57 : vector<16x16xf32>
    %cst_35 = arith.constant 0.797884583 : f32
    %59 = vector.broadcast %cst_35 : f32 to vector<16x16xf32>
    %60 = arith.mulf %59, %58 : vector<16x16xf32>
    %61 = math.tanh %60 : vector<16x16xf32>
    %cst_36 = arith.constant 1.000000e+00 : f32
    %62 = vector.broadcast %cst_36 : f32 to vector<16x16xf32>
    %63 = arith.addf %62, %61 : vector<16x16xf32>
    %64 = arith.mulf %53, %63 : vector<16x16xf32>
    %65 = arith.truncf %64 : vector<16x16xf32> to vector<16x16xbf16>
    %c0_37 = arith.constant 0 : index
    %c0_38 = arith.constant 0 : index
    %66 = vector.load %arg12[%c0_37, %c0_38] : memref<16x128xbf16, #tpu.memory_space<vmem>>, vector<16x128xbf16>
    %cst_39 = arith.constant dense<0.000000e+00> : vector<16x128xf32>
    %67 = tpu.matmul %65, %66, %cst_39 {dimension_numbers = #tpu.dot_dimension_numbers<[1], [0], [0], [1], [0, 0, 1, 1], [], []>} : vector<16x16xbf16>, vector<16x128xbf16>, vector<16x128xf32> -> vector<16x128xf32>
    %c0_40 = arith.constant 0 : index
    %c0_41 = arith.constant 0 : index
    %68 = vector.load %arg13[%c0_40, %c0_41] : memref<1x128xf32, #tpu.memory_space<vmem>>, vector<1x128xf32>
    %69 = vector.broadcast %68 : vector<1x128xf32> to vector<16x128xf32>
    %70 = arith.addf %67, %69 : vector<16x128xf32>
    %71 = arith.truncf %70 : vector<16x128xf32> to vector<16x128xbf16>
    %c0_42 = arith.constant 0 : index
    %c0_43 = arith.constant 0 : index
    %72 = vector.load %arg14[%c0_42, %c0_43] : memref<16x128xbf16, #tpu.memory_space<vmem>>, vector<16x128xbf16>
    tpu.vector_store %arg14[%c0_42, %c0_43], %71 {strides = array<i32>} : memref<16x128xbf16, #tpu.memory_space<vmem>>, vector<16x128xbf16>,
    return
  }
  func.func @transform_0(%arg0: i32) -> (i32, i32) {
    %c0_i32 = arith.constant 0 : i32
    %c0_i32_0 = arith.constant 0 : i32
    return %arg0, %c0_i32 : i32, i32
  }
  func.func @transform_1(%arg0: i32) -> (i32, i32) {
    %c0_i32 = arith.constant 0 : i32
    %c0_i32_0 = arith.constant 0 : i32
    return %arg0, %c0_i32 : i32, i32
  }
  func.func @transform_2(%arg0: i32) -> (i32, i32) {
    %c0_i32 = arith.constant 0 : i32
    %c0_i32_0 = arith.constant 0 : i32
    return %arg0, %c0_i32 : i32, i32
  }
  func.func @transform_3(%arg0: i32) -> (i32, i32) {
    %c0_i32 = arith.constant 0 : i32
    %c0_i32_0 = arith.constant 0 : i32
    %c0_i32_1 = arith.constant 0 : i32
    return %c0_i32, %c0_i32_0 : i32, i32
  }
  func.func @transform_4(%arg0: i32) -> (i32, i32) {
    %c0_i32 = arith.constant 0 : i32
    %c0_i32_0 = arith.constant 0 : i32
    %c0_i32_1 = arith.constant 0 : i32
    return %c0_i32, %c0_i32_0 : i32, i32
  }
  func.func @transform_5(%arg0: i32) -> (i32, i32) {
    %c0_i32 = arith.constant 0 : i32
    %c0_i32_0 = arith.constant 0 : i32
    %c0_i32_1 = arith.constant 0 : i32
    return %c0_i32, %c0_i32_0 : i32, i32
  }
  func.func @transform_6(%arg0: i32) -> (i32, i32) {
    %c0_i32 = arith.constant 0 : i32
    %c0_i32_0 = arith.constant 0 : i32
    %c0_i32_1 = arith.constant 0 : i32
    return %c0_i32, %c0_i32_0 : i32, i32
  }
  func.func @transform_7(%arg0: i32) -> (i32, i32) {
    %c0_i32 = arith.constant 0 : i32
    %c0_i32_0 = arith.constant 0 : i32
    %c0_i32_1 = arith.constant 0 : i32
    return %c0_i32, %c0_i32_0 : i32, i32
  }
  func.func @transform_8(%arg0: i32) -> (i32, i32) {
    %c0_i32 = arith.constant 0 : i32
    %c0_i32_0 = arith.constant 0 : i32
    %c0_i32_1 = arith.constant 0 : i32
    return %c0_i32, %c0_i32_0 : i32, i32
  }
  func.func @transform_9(%arg0: i32) -> (i32, i32) {
    %c0_i32 = arith.constant 0 : i32
    %c0_i32_0 = arith.constant 0 : i32
    %c0_i32_1 = arith.constant 0 : i32
    return %c0_i32, %c0_i32_0 : i32, i32
  }
  func.func @transform_10(%arg0: i32) -> (i32, i32) {
    %c0_i32 = arith.constant 0 : i32
    %c0_i32_0 = arith.constant 0 : i32
    %c0_i32_1 = arith.constant 0 : i32
    return %c0_i32, %c0_i32_0 : i32, i32
  }
  func.func @transform_11(%arg0: i32) -> (i32, i32) {
    %c0_i32 = arith.constant 0 : i32
    %c0_i32_0 = arith.constant 0 : i32
    %c0_i32_1 = arith.constant 0 : i32
    return %c0_i32, %c0_i32_0 : i32, i32
  }
  func.func @transform_12(%arg0: i32) -> (i32, i32) {
    %c0_i32 = arith.constant 0 : i32
    %c0_i32_0 = arith.constant 0 : i32
    %c0_i32_1 = arith.constant 0 : i32
    return %c0_i32, %c0_i32_0 : i32, i32
  }
  func.func @transform_13(%arg0: i32) -> (i32, i32) {
    %c0_i32 = arith.constant 0 : i32
    %c0_i32_0 = arith.constant 0 : i32
    return %arg0, %c0_i32 : i32, i32
  }
}

</mosaic_0001>

<llo_original>
// kernel: main_task_forward.1
$region0: #{main_task_forward.1}
  #allocation0 [shape = 'u32[]', space=smem, size = 0x4, offset = 0x4, fixed_abs, tag = 'smem constant byte address 0x4 - core index']
  #allocation1 [shape = 'u32[144,128]{1,0:T(1,128)}', space=vmem, size = 0x12000, scoped, tag = 'internal scratch']
  %s0 = inlined_call_operand.vmem [shape: bf16[16,32], index: 0, kind: input, shape index: {}]
  %s1 = inlined_call_operand.vmem [shape: bf16[16,32], index: 1, kind: input, shape index: {}]
  %s2 = inlined_call_operand.vmem [shape: bf16[16,32], index: 2, kind: input, shape index: {}]
  %s3 = inlined_call_operand.vmem [shape: bf16[32,96], index: 3, kind: input, shape index: {}]
  %s4 = inlined_call_operand.vmem [shape: bf16[32,96], index: 4, kind: input, shape index: {}]
  %s5 = inlined_call_operand.vmem [shape: bf16[32,96], index: 5, kind: input, shape index: {}]
  %s6 = inlined_call_operand.vmem [shape: f32[1,96], index: 6, kind: input, shape index: {}]
  %s7 = inlined_call_operand.vmem [shape: bf16[96,32], index: 7, kind: input, shape index: {}]
  %s8 = inlined_call_operand.vmem [shape: f32[1,32], index: 8, kind: input, shape index: {}]
  %s9 = inlined_call_operand.vmem [shape: bf16[32,16], index: 9, kind: input, shape index: {}]
  %s10 = inlined_call_operand.vmem [shape: f32[1,16], index: 10, kind: input, shape index: {}]
  %s11 = inlined_call_operand.vmem [shape: bf16[16,128], index: 11, kind: input, shape index: {}]
  %s12 = inlined_call_operand.vmem [shape: f32[1,128], index: 12, kind: input, shape index: {}]
  %s13 = inlined_call_operand.vmem [shape: bf16[16,128], index: 13, kind: output, shape index: {}]
  %s14 = sld [smem:[#allocation0]]
  $region62: #{main_task_forward.1} parent=0
    _
  %s16 = ssub.s32 1, %s14
  %s17 = scalar_select 0, %s16, %s14
  // Predicated region
  $region2: #{main_task_forward.1} parent=0 // pred_check
    _
  $region3: #{main_task_forward.1} parent=0 // pred_check_branch
    %19 = sbr.rel (0) target = $region5
  $region4: #{main_task_forward.1} parent=0 // pred_region
    _
  $region5: #{main_task_forward.1} parent=0 // pred_fallthru
    _
  // Predicated region
  $region6: #{main_task_forward.1} parent=0 // pred_check
    _
  $region7: #{main_task_forward.1} parent=0 // pred_check_branch
    %21 = sbr.rel (0) target = $region9
  $region8: #{main_task_forward.1} parent=0 // pred_region
    _
  $region9: #{main_task_forward.1} parent=0 // pred_fallthru
    _
  // Predicated region
  $region10: #{main_task_forward.1} parent=0 // pred_check
    _
  $region11: #{main_task_forward.1} parent=0 // pred_check_branch
    %23 = sbr.rel (0) target = $region13
  $region12: #{main_task_forward.1} parent=0 // pred_region
    _
  $region13: #{main_task_forward.1} parent=0 // pred_fallthru
    _
  // Predicated region
  $region14: #{main_task_forward.1} parent=0 // pred_check
    _
  $region15: #{main_task_forward.1} parent=0 // pred_check_branch
    %25 = sbr.rel (0) target = $region17
  $region16: #{main_task_forward.1} parent=0 // pred_region
    _
  $region17: #{main_task_forward.1} parent=0 // pred_fallthru
    _
  // Predicated region
  $region18: #{main_task_forward.1} parent=0 // pred_check
    _
  $region19: #{main_task_forward.1} parent=0 // pred_check_branch
    %27 = sbr.rel (0) target = $region21
  $region20: #{main_task_forward.1} parent=0 // pred_region
    _
  $region21: #{main_task_forward.1} parent=0 // pred_fallthru
    _
  // Predicated region
  $region22: #{main_task_forward.1} parent=0 // pred_check
    _
  $region23: #{main_task_forward.1} parent=0 // pred_check_branch
    %29 = sbr.rel (0) target = $region25
  $region24: #{main_task_forward.1} parent=0 // pred_region
    _
  $region25: #{main_task_forward.1} parent=0 // pred_fallthru
    _
  // Predicated region
  $region26: #{main_task_forward.1} parent=0 // pred_check
    _
  $region27: #{main_task_forward.1} parent=0 // pred_check_branch
    %31 = sbr.rel (0) target = $region29
  $region28: #{main_task_forward.1} parent=0 // pred_region
    _
  $region29: #{main_task_forward.1} parent=0 // pred_fallthru
    _
  // Predicated region
  $region30: #{main_task_forward.1} parent=0 // pred_check
    _
  $region31: #{main_task_forward.1} parent=0 // pred_check_branch
    %33 = sbr.rel (0) target = $region33
  $region32: #{main_task_forward.1} parent=0 // pred_region
    _
  $region33: #{main_task_forward.1} parent=0 // pred_fallthru
    _
  // Predicated region
  $region34: #{main_task_forward.1} parent=0 // pred_check
    _
  $region35: #{main_task_forward.1} parent=0 // pred_check_branch
    %35 = sbr.rel (0) target = $region37
  $region36: #{main_task_forward.1} parent=0 // pred_region
    _
  $region37: #{main_task_forward.1} parent=0 // pred_fallthru
    _
  // Predicated region
  $region38: #{main_task_forward.1} parent=0 // pred_check
    _
  $region39: #{main_task_forward.1} parent=0 // pred_check_branch
    %37 = sbr.rel (0) target = $region41
  $region40: #{main_task_forward.1} parent=0 // pred_region
    _
  $region41: #{main_task_forward.1} parent=0 // pred_fallthru
    _
  // Predicated region
  $region42: #{main_task_forward.1} parent=0 // pred_check
    _
  $region43: #{main_task_forward.1} parent=0 // pred_check_branch
    %39 = sbr.rel (0) target = $region45
  $region44: #{main_task_forward.1} parent=0 // pred_region
    _
  $region45: #{main_task_forward.1} parent=0 // pred_fallthru
    _
  // Predicated region
  $region46: #{main_task_forward.1} parent=0 // pred_check
    _
  $region47: #{main_task_forward.1} parent=0 // pred_check_branch
    %41 = sbr.rel (0) target = $region49
  $region48: #{main_task_forward.1} parent=0 // pred_region
    _
  $region49: #{main_task_forward.1} parent=0 // pred_fallthru
    _
  // Predicated region
  $region50: #{main_task_forward.1} parent=0 // pred_check
    _
  $region51: #{main_task_forward.1} parent=0 // pred_check_branch
    %43 = sbr.rel (0) target = $region53
  $region52: #{main_task_forward.1} parent=0 // pred_region
    _
  $region53: #{main_task_forward.1} parent=0 // pred_fallthru
    _
  %v45 = vld [vmem:[%s0] sm:$0xf]
  %v46 = vld [vmem:[%s0 + $0x4] sm:$0xf]
  %v47 = vld [vmem:[%s3] sm:$0xf]
  %v48 = vld [vmem:[%s3 + $0x4] sm:$0xf]
  %v49 = vld [vmem:[%s3 + $0x8] sm:$0xf]
  %v50 = vld [vmem:[%s3 + $0xc] sm:$0xf]
  %v51 = vld [vmem:[%s1] sm:$0xf]
  %v52 = vld [vmem:[%s1 + $0x4] sm:$0xf]
  %v53 = vld [vmem:[%s4] sm:$0xf]
  %v54 = vld [vmem:[%s4 + $0x4] sm:$0xf]
  %v55 = vld [vmem:[%s4 + $0x8] sm:$0xf]
  %v56 = vld [vmem:[%s4 + $0xc] sm:$0xf]
  %v59 = vunpack.c.l.b16 %v51
  %v60 = vunpack.c.l.b16 %v52
  %v61 = vpack.c.b16 %v60, %v59
  %v66 = vunpack.c.l.b16 %v53
  %v67 = vunpack.c.l.b16 %v54
  %v68 = vunpack.c.l.b16 %v55
  %v69 = vunpack.c.l.b16 %v56
  %v70 = vpack.c.b16 %v67, %v66
  %v71 = vpack.c.b16 %v69, %v68
  %vm74 = vcmask 261120
  %v76 = vsel %vm74, %v61, 0
  %78 = vmatprep.subr.bf16.mxu0 0
  %79 = vmatpush1.bf16.msra.mxu0 %v70
  %80 = vmatprep.subr.bf16.mxu0 0
  %81 = vmatpush1.bf16.msra.mxu0 %v71
  %82 = vmatprep.subr.bf16.mxu0 0
  %83 = vmatpush1.bf16.msra.mxu0 0
  %84 = vmatprep.subr.bf16.mxu0 0
  %85 = vmatpush1.bf16.msra.mxu0 0
  %86 = vmatprep.subr.bf16.mxu0 0
  %87 = vmatpush1.bf16.msra.mxu0 0
  %88 = vmatprep.subr.bf16.mxu0 0
  %89 = vmatpush1.bf16.msra.mxu0 0
  %90 = vmatprep.subr.bf16.mxu0 0
  %91 = vmatpush1.bf16.msra.mxu0 0
  %92 = vmatprep.subr.bf16.mxu0 0
  %93 = vmatpush1.bf16.msra.mxu0 0
  %94 = vmatprep.subr.bf16.mxu0 0
  %95 = vmatpush1.bf16.msra.mxu0 0
  %96 = vmatprep.subr.bf16.mxu0 0
  %97 = vmatpush1.bf16.msra.mxu0 0
  %98 = vmatprep.subr.bf16.mxu0 0
  %99 = vmatpush1.bf16.msra.mxu0 0
  %100 = vmatprep.subr.bf16.mxu0 0
  %101 = vmatpush1.bf16.msra.mxu0 0
  %102 = vmatprep.subr.bf16.mxu0 0
  %103 = vmatpush1.bf16.msra.mxu0 0
  %104 = vmatprep.subr.bf16.mxu0 0
  %105 = vmatpush1.bf16.msra.mxu0 0
  %106 = vmatprep.subr.bf16.mxu0 0
  %107 = vmatpush1.bf16.msra.mxu0 0
  %108 = vmatprep.subr.bf16.mxu0 0
  %109 = vmatpush1.bf16.msra.mxu0 0
  %110 = vmatprep.mubr.bf16.mxu0 0
  %111 = vmatmul.mubr.bf16.gmra.mrb[0].mxu0 %v76
  %v112 = vpop.f32.mrb[0].mxu0
  %v113 = vadd.f32 0.0, %v112
  %v114 = vpop.f32.mrb[0].mxu0
  %v115 = vpop.f32.mrb[0].mxu0
  %v116 = vadd.f32 0.0, %v115
  %v117 = vpop.f32.mrb[0].mxu0
  %118 = vdwg.mxu0
  %v121 = vunpack.c.l.b16 %v45
  %v122 = vunpack.c.l.b16 %v46
  %v123 = vpack.c.b16 %v122, %v121
  %v128 = vunpack.c.l.b16 %v47
  %v129 = vunpack.c.l.b16 %v48
  %v130 = vunpack.c.l.b16 %v49
  %v131 = vunpack.c.l.b16 %v50
  %v132 = vpack.c.b16 %v129, %v128
  %v133 = vpack.c.b16 %v131, %v130
  %v137 = vsel %vm74, %v123, 0
  %139 = vmatprep.subr.bf16.mxu0 0
  %140 = vmatpush1.bf16.msra.mxu0 %v132
  %141 = vmatprep.subr.bf16.mxu0 0
  %142 = vmatpush1.bf16.msra.mxu0 %v133
  %143 = vmatprep.subr.bf16.mxu0 0
  %144 = vmatpush1.bf16.msra.mxu0 0
  %145 = vmatprep.subr.bf16.mxu0 0
  %146 = vmatpush1.bf16.msra.mxu0 0
  %147 = vmatprep.subr.bf16.mxu0 0
  %148 = vmatpush1.bf16.msra.mxu0 0
  %149 = vmatprep.subr.bf16.mxu0 0
  %150 = vmatpush1.bf16.msra.mxu0 0
  %151 = vmatprep.subr.bf16.mxu0 0
  %152 = vmatpush1.bf16.msra.mxu0 0
  %153 = vmatprep.subr.bf16.mxu0 0
  %154 = vmatpush1.bf16.msra.mxu0 0
  %155 = vmatprep.subr.bf16.mxu0 0
  %156 = vmatpush1.bf16.msra.mxu0 0
  %157 = vmatprep.subr.bf16.mxu0 0
  %158 = vmatpush1.bf16.msra.mxu0 0
  %159 = vmatprep.subr.bf16.mxu0 0
  %160 = vmatpush1.bf16.msra.mxu0 0
  %161 = vmatprep.subr.bf16.mxu0 0
  %162 = vmatpush1.bf16.msra.mxu0 0
  %163 = vmatprep.subr.bf16.mxu0 0
  %164 = vmatpush1.bf16.msra.mxu0 0
  %165 = vmatprep.subr.bf16.mxu0 0
  %166 = vmatpush1.bf16.msra.mxu0 0
  %167 = vmatprep.subr.bf16.mxu0 0
  %168 = vmatpush1.bf16.msra.mxu0 0
  %169 = vmatprep.subr.bf16.mxu0 0
  %170 = vmatpush1.bf16.msra.mxu0 0
  %171 = vmatprep.mubr.bf16.mxu0 0
  %172 = vmatmul.mubr.bf16.gmra.mrb[0].mxu0 %v137
  %v173 = vpop.f32.mrb[0].mxu0
  %v174 = vadd.f32 %v113, %v173
  %v175 = vpop.f32.mrb[0].mxu0
  %v176 = vpop.f32.mrb[0].mxu0
  %v177 = vadd.f32 %v116, %v176
  %v178 = vpop.f32.mrb[0].mxu0
  %179 = vdwg.mxu0
  %v180 = vld [vmem:[%s2] sm:$0xf]
  %v181 = vld [vmem:[%s2 + $0x4] sm:$0xf]
  %v182 = vld [vmem:[%s5] sm:$0xf]
  %v183 = vld [vmem:[%s5 + $0x4] sm:$0xf]
  %v184 = vld [vmem:[%s5 + $0x8] sm:$0xf]
  %v185 = vld [vmem:[%s5 + $0xc] sm:$0xf]
  %v188 = vunpack.c.l.b16 %v180
  %v189 = vunpack.c.l.b16 %v181
  %v190 = vpack.c.b16 %v189, %v188
  %v195 = vunpack.c.l.b16 %v182
  %v196 = vunpack.c.l.b16 %v183
  %v197 = vunpack.c.l.b16 %v184
  %v198 = vunpack.c.l.b16 %v185
  %v199 = vpack.c.b16 %v196, %v195
  %v200 = vpack.c.b16 %v198, %v197
  %v204 = vsel %vm74, %v190, 0
  %206 = vmatprep.subr.bf16.mxu0 0
  %207 = vmatpush1.bf16.msra.mxu0 %v199
  %208 = vmatprep.subr.bf16.mxu0 0
  %209 = vmatpush1.bf16.msra.mxu0 %v200
  %210 = vmatprep.subr.bf16.mxu0 0
  %211 = vmatpush1.bf16.msra.mxu0 0
  %212 = vmatprep.subr.bf16.mxu0 0
  %213 = vmatpush1.bf16.msra.mxu0 0
  %214 = vmatprep.subr.bf16.mxu0 0
  %215 = vmatpush1.bf16.msra.mxu0 0
  %216 = vmatprep.subr.bf16.mxu0 0
  %217 = vmatpush1.bf16.msra.mxu0 0
  %218 = vmatprep.subr.bf16.mxu0 0
  %219 = vmatpush1.bf16.msra.mxu0 0
  %220 = vmatprep.subr.bf16.mxu0 0
  %221 = vmatpush1.bf16.msra.mxu0 0
  %222 = vmatprep.subr.bf16.mxu0 0
  %223 = vmatpush1.bf16.msra.mxu0 0
  %224 = vmatprep.subr.bf16.mxu0 0
  %225 = vmatpush1.bf16.msra.mxu0 0
  %226 = vmatprep.subr.bf16.mxu0 0
  %227 = vmatpush1.bf16.msra.mxu0 0
  %228 = vmatprep.subr.bf16.mxu0 0
  %229 = vmatpush1.bf16.msra.mxu0 0
  %230 = vmatprep.subr.bf16.mxu0 0
  %231 = vmatpush1.bf16.msra.mxu0 0
  %232 = vmatprep.subr.bf16.mxu0 0
  %233 = vmatpush1.bf16.msra.mxu0 0
  %234 = vmatprep.subr.bf16.mxu0 0
  %235 = vmatpush1.bf16.msra.mxu0 0
  %236 = vmatprep.subr.bf16.mxu0 0
  %237 = vmatpush1.bf16.msra.mxu0 0
  %238 = vmatprep.mubr.bf16.mxu0 0
  %239 = vmatmul.mubr.bf16.gmra.mrb[0].mxu0 %v204
  %v240 = vpop.f32.mrb[0].mxu0
  %v241 = vadd.f32 0.0, %v240
  %v242 = vpop.f32.mrb[0].mxu0
  %v243 = vpop.f32.mrb[0].mxu0
  %v244 = vadd.f32 0.0, %v243
  %v245 = vpop.f32.mrb[0].mxu0
  %246 = vdwg.mxu0
  %v247 = vadd.f32 %v174, %v241
  %v248 = vadd.f32 %v177, %v244
  %v249 = vld [vmem:[%s6] sm:$0x1]
  %v251 = vlaneseq
  %v252 = vshrl.u32 %v251, 7
  %v253 = vsub.s32 0, %v252
  %v254 = vrot.slane %v249, %v253
  %v256 = vadd.f32 %v247, %v254
  %v257 = vadd.f32 %v248, %v254
  %v258 = vmul.f32 %v256, 0.5
  %v259 = vmul.f32 %v257, 0.5
  %v260 = vmul.f32 %v256, 0.044715
  %v261 = vmul.f32 %v257, 0.044715
  %v262 = vmul.f32 %v260, %v256
  %v263 = vmul.f32 %v261, %v257
  %v264 = vmul.f32 %v262, %v256
  %v265 = vmul.f32 %v263, %v257
  %v266 = vadd.f32 %v256, %v264
  %v267 = vadd.f32 %v257, %v265
  %v268 = vmul.f32 %v266, 0.7978846
  %v269 = vmul.f32 %v267, 0.7978846
  %v270 = vtanh.pop %v268
  %v271 = vtanh.pop %v269
  %v272 = vadd.f32 %v270, 1.0
  %v273 = vadd.f32 %v271, 1.0
  %v274 = vmul.f32 %v258, %v272
  %v275 = vmul.f32 %v259, %v273
  %v276 = vpack.c.bf16 %v275, %v274
  %v277 = vld [vmem:[%s7] sm:$0xf]
  %v278 = vld [vmem:[%s7 + $0x4] sm:$0xf]
  %v279 = vld [vmem:[%s7 + $0x8] sm:$0xf]
  %v280 = vld [vmem:[%s7 + $0xc] sm:$0xf]
  %v281 = vld [vmem:[%s7 + $0x10] sm:$0xf]
  %v282 = vld [vmem:[%s7 + $0x14] sm:$0xf]
  %v283 = vld [vmem:[%s7 + $0x18] sm:$0xf]
  %v284 = vld [vmem:[%s7 + $0x1c] sm:$0xf]
  %v285 = vld [vmem:[%s7 + $0x20] sm:$0xf]
  %v286 = vld [vmem:[%s7 + $0x24] sm:$0xf]
  %v287 = vld [vmem:[%s7 + $0x28] sm:$0xf]
  %v288 = vld [vmem:[%s7 + $0x2c] sm:$0xf]
  %v289 = vld [vmem:[%s8] sm:$0x1]
  %v291 = vlaneseq
  %v292 = vshrl.u32 %v291, 7
  %v293 = vsub.s32 0, %v292
  %v294 = vrot.slane %v289, %v293
  %v308 = vunpack.c.l.b16 %v277
  %v309 = vunpack.c.l.b16 %v278
  %v310 = vunpack.c.l.b16 %v279
  %v311 = vunpack.c.l.b16 %v280
  %v312 = vunpack.c.l.b16 %v281
  %v313 = vunpack.c.l.b16 %v282
  %v314 = vunpack.c.l.b16 %v283
  %v315 = vunpack.c.l.b16 %v284
  %v316 = vunpack.c.l.b16 %v285
  %v317 = vunpack.c.l.b16 %v286
  %v318 = vunpack.c.l.b16 %v287
  %v319 = vunpack.c.l.b16 %v288
  %v320 = vpack.c.b16 %v309, %v308
  %v321 = vpack.c.b16 %v311, %v310
  %v322 = vpack.c.b16 %v313, %v312
  %v323 = vpack.c.b16 %v315, %v314
  %v324 = vpack.c.b16 %v317, %v316
  %v325 = vpack.c.b16 %v319, %v318
  %vm332 = vcmask 785408
  %v334 = vsel %vm332, %v276, 0
  %336 = vmatprep.subr.bf16.mxu0 0
  %337 = vmatpush1.bf16.msra.mxu0 %v320
  %338 = vmatprep.subr.bf16.mxu0 0
  %339 = vmatpush1.bf16.msra.mxu0 %v321
  %340 = vmatprep.subr.bf16.mxu0 0
  %341 = vmatpush1.bf16.msra.mxu0 %v322
  %342 = vmatprep.subr.bf16.mxu0 0
  %343 = vmatpush1.bf16.msra.mxu0 %v323
  %344 = vmatprep.subr.bf16.mxu0 0
  %345 = vmatpush1.bf16.msra.mxu0 %v324
  %346 = vmatprep.subr.bf16.mxu0 0
  %347 = vmatpush1.bf16.msra.mxu0 %v325
  %348 = vmatprep.subr.bf16.mxu0 0
  %349 = vmatpush1.bf16.msra.mxu0 0
  %350 = vmatprep.subr.bf16.mxu0 0
  %351 = vmatpush1.bf16.msra.mxu0 0
  %352 = vmatprep.subr.bf16.mxu0 0
  %353 = vmatpush1.bf16.msra.mxu0 0
  %354 = vmatprep.subr.bf16.mxu0 0
  %355 = vmatpush1.bf16.msra.mxu0 0
  %356 = vmatprep.subr.bf16.mxu0 0
  %357 = vmatpush1.bf16.msra.mxu0 0
  %358 = vmatprep.subr.bf16.mxu0 0
  %359 = vmatpush1.bf16.msra.mxu0 0
  %360 = vmatprep.subr.bf16.mxu0 0
  %361 = vmatpush1.bf16.msra.mxu0 0
  %362 = vmatprep.subr.bf16.mxu0 0
  %363 = vmatpush1.bf16.msra.mxu0 0
  %364 = vmatprep.subr.bf16.mxu0 0
  %365 = vmatpush1.bf16.msra.mxu0 0
  %366 = vmatprep.subr.bf16.mxu0 0
  %367 = vmatpush1.bf16.msra.mxu0 0
  %368 = vmatprep.mubr.bf16.mxu0 0
  %369 = vmatmul.mubr.bf16.gmra.mrb[0].mxu0 %v334
  %v370 = vpop.f32.mrb[0].mxu0
  %v371 = vadd.f32 %v294, %v370
  %v372 = vpop.f32.mrb[0].mxu0
  %v373 = vpop.f32.mrb[0].mxu0
  %v374 = vadd.f32 %v294, %v373
  %v375 = vpop.f32.mrb[0].mxu0
  %376 = vdwg.mxu0
  %v377 = vmul.f32 %v371, 0.5
  %v378 = vmul.f32 %v374, 0.5
  %v379 = vmul.f32 %v371, 0.044715
  %v380 = vmul.f32 %v374, 0.044715
  %v381 = vmul.f32 %v379, %v371
  %v382 = vmul.f32 %v380, %v374
  %v383 = vmul.f32 %v381, %v371
  %v384 = vmul.f32 %v382, %v374
  %v385 = vadd.f32 %v371, %v383
  %v386 = vadd.f32 %v374, %v384
  %v387 = vmul.f32 %v385, 0.7978846
  %v388 = vmul.f32 %v386, 0.7978846
  %v389 = vtanh.pop %v387
  %v390 = vtanh.pop %v388
  %v391 = vadd.f32 %v389, 1.0
  %v392 = vadd.f32 %v390, 1.0
  %v393 = vmul.f32 %v377, %v391
  %v394 = vmul.f32 %v378, %v392
  %v395 = vpack.c.bf16 %v394, %v393
  %v396 = vld [vmem:[%s9] sm:$0xf]
  %v397 = vld [vmem:[%s9 + $0x4] sm:$0xf]
  %v398 = vld [vmem:[%s9 + $0x8] sm:$0xf]
  %v399 = vld [vmem:[%s9 + $0xc] sm:$0xf]
  %v400 = vld [vmem:[%s10] sm:$0x1]
  %v402 = vlaneseq
  %v403 = vshrl.u32 %v402, 7
  %v404 = vsub.s32 0, %v403
  %v405 = vrot.slane %v400, %v404
  %v411 = vunpack.c.l.b16 %v396
  %v412 = vunpack.c.l.b16 %v397
  %v413 = vunpack.c.l.b16 %v398
  %v414 = vunpack.c.l.b16 %v399
  %v415 = vpack.c.b16 %v412, %v411
  %v416 = vpack.c.b16 %v414, %v413
  %v420 = vsel %vm74, %v395, 0
  %422 = vmatprep.subr.bf16.mxu0 0
  %423 = vmatpush1.bf16.msra.mxu0 %v415
  %424 = vmatprep.subr.bf16.mxu0 0
  %425 = vmatpush1.bf16.msra.mxu0 %v416
  %426 = vmatprep.subr.bf16.mxu0 0
  %427 = vmatpush1.bf16.msra.mxu0 0
  %428 = vmatprep.subr.bf16.mxu0 0
  %429 = vmatpush1.bf16.msra.mxu0 0
  %430 = vmatprep.subr.bf16.mxu0 0
  %431 = vmatpush1.bf16.msra.mxu0 0
  %432 = vmatprep.subr.bf16.mxu0 0
  %433 = vmatpush1.bf16.msra.mxu0 0
  %434 = vmatprep.subr.bf16.mxu0 0
  %435 = vmatpush1.bf16.msra.mxu0 0
  %436 = vmatprep.subr.bf16.mxu0 0
  %437 = vmatpush1.bf16.msra.mxu0 0
  %438 = vmatprep.subr.bf16.mxu0 0
  %439 = vmatpush1.bf16.msra.mxu0 0
  %440 = vmatprep.subr.bf16.mxu0 0
  %441 = vmatpush1.bf16.msra.mxu0 0
  %442 = vmatprep.subr.bf16.mxu0 0
  %443 = vmatpush1.bf16.msra.mxu0 0
  %444 = vmatprep.subr.bf16.mxu0 0
  %445 = vmatpush1.bf16.msra.mxu0 0
  %446 = vmatprep.subr.bf16.mxu0 0
  %447 = vmatpush1.bf16.msra.mxu0 0
  %448 = vmatprep.subr.bf16.mxu0 0
  %449 = vmatpush1.bf16.msra.mxu0 0
  %450 = vmatprep.subr.bf16.mxu0 0
  %451 = vmatpush1.bf16.msra.mxu0 0
  %452 = vmatprep.subr.bf16.mxu0 0
  %453 = vmatpush1.bf16.msra.mxu0 0
  %454 = vmatprep.mubr.bf16.mxu0 0
  %455 = vmatmul.mubr.bf16.gmra.mrb[0].mxu0 %v420
  %v456 = vpop.f32.mrb[0].mxu0
  %v457 = vadd.f32 %v405, %v456
  %v458 = vpop.f32.mrb[0].mxu0
  %v459 = vpop.f32.mrb[0].mxu0
  %v460 = vadd.f32 %v405, %v459
  %v461 = vpop.f32.mrb[0].mxu0
  %462 = vdwg.mxu0
  %v463 = vmul.f32 %v457, 0.5
  %v464 = vmul.f32 %v460, 0.5
  %v465 = vmul.f32 %v457, 0.044715
  %v466 = vmul.f32 %v460, 0.044715
  %v467 = vmul.f32 %v465, %v457
  %v468 = vmul.f32 %v466, %v460
  %v469 = vmul.f32 %v467, %v457
  %v470 = vmul.f32 %v468, %v460
  %v471 = vadd.f32 %v457, %v469
  %v472 = vadd.f32 %v460, %v470
  %v473 = vmul.f32 %v471, 0.7978846
  %v474 = vmul.f32 %v472, 0.7978846
  %v475 = vtanh.pop %v473
  %v476 = vtanh.pop %v474
  %v477 = vadd.f32 %v475, 1.0
  %v478 = vadd.f32 %v476, 1.0
  %v479 = vmul.f32 %v463, %v477
  %v480 = vmul.f32 %v464, %v478
  %v481 = vpack.c.bf16 %v480, %v479
  %v482 = vld [vmem:[%s11] sm:$0xf]
  %v483 = vld [vmem:[%s11 + $0x4] sm:$0xf]
  %v484 = vld [vmem:[%s12] sm:$0x1]
  %v486 = vlaneseq
  %v487 = vshrl.u32 %v486, 7
  %v488 = vsub.s32 0, %v487
  %v489 = vrot.slane %v484, %v488
  %v493 = vunpack.c.l.b16 %v482
  %v494 = vunpack.c.l.b16 %v483
  %v495 = vpack.c.b16 %v494, %v493
  %vm497 = vcmask 130048
  %v499 = vsel %vm497, %v481, 0
  %501 = vmatprep.subr.bf16.mxu0 0
  %502 = vmatpush1.bf16.msra.mxu0 %v495
  %503 = vmatprep.subr.bf16.mxu0 0
  %504 = vmatpush1.bf16.msra.mxu0 0
  %505 = vmatprep.subr.bf16.mxu0 0
  %506 = vmatpush1.bf16.msra.mxu0 0
  %507 = vmatprep.subr.bf16.mxu0 0
  %508 = vmatpush1.bf16.msra.mxu0 0
  %509 = vmatprep.subr.bf16.mxu0 0
  %510 = vmatpush1.bf16.msra.mxu0 0
  %511 = vmatprep.subr.bf16.mxu0 0
  %512 = vmatpush1.bf16.msra.mxu0 0
  %513 = vmatprep.subr.bf16.mxu0 0
  %514 = vmatpush1.bf16.msra.mxu0 0
  %515 = vmatprep.subr.bf16.mxu0 0
  %516 = vmatpush1.bf16.msra.mxu0 0
  %517 = vmatprep.subr.bf16.mxu0 0
  %518 = vmatpush1.bf16.msra.mxu0 0
  %519 = vmatprep.subr.bf16.mxu0 0
  %520 = vmatpush1.bf16.msra.mxu0 0
  %521 = vmatprep.subr.bf16.mxu0 0
  %522 = vmatpush1.bf16.msra.mxu0 0
  %523 = vmatprep.subr.bf16.mxu0 0
  %524 = vmatpush1.bf16.msra.mxu0 0
  %525 = vmatprep.subr.bf16.mxu0 0
  %526 = vmatpush1.bf16.msra.mxu0 0
  %527 = vmatprep.subr.bf16.mxu0 0
  %528 = vmatpush1.bf16.msra.mxu0 0
  %529 = vmatprep.subr.bf16.mxu0 0
  %530 = vmatpush1.bf16.msra.mxu0 0
  %531 = vmatprep.subr.bf16.mxu0 0
  %532 = vmatpush1.bf16.msra.mxu0 0
  %533 = vmatprep.mubr.bf16.mxu0 0
  %534 = vmatmul.mubr.bf16.gmra.mrb[0].mxu0 %v499
  %v535 = vpop.f32.mrb[0].mxu0
  %v536 = vadd.f32 %v489, %v535
  %v537 = vpop.f32.mrb[0].mxu0
  %v538 = vpop.f32.mrb[0].mxu0
  %v539 = vadd.f32 %v489, %v538
  %v540 = vpop.f32.mrb[0].mxu0
  %541 = vdwg.mxu0
  %v542 = vpack.c.bf16 %v539, %v536
  %v544 = vunpack.c.l.b16 %v542
  %v545 = vunpack.c.h.b16 %v542
  %v546 = vpack.c.b16 %v544, %v544
  %v547 = vpack.c.b16 %v545, %v545
  %550 = vst [vmem:[%s13] sm:$0xf] %v546
  %551 = vst [vmem:[%s13 + $0x4] sm:$0xf] %v547
  // Predicated region
  $region54: #{main_task_forward.1} parent=0 // pred_check
    _
  $region55: #{main_task_forward.1} parent=0 // pred_check_branch
    %553 = sbr.rel (0) target = $region57
  $region56: #{main_task_forward.1} parent=0 // pred_region
    _
  $region57: #{main_task_forward.1} parent=0 // pred_fallthru
    _
  // Predicated region
  $region58: #{main_task_forward.1} parent=0 // pred_check
    _
  $region59: #{main_task_forward.1} parent=0 // pred_check_branch
    %555 = sbr.rel (0) target = $region61
  $region60: #{main_task_forward.1} parent=0 // pred_region
    _
  $region61: #{main_task_forward.1} parent=0 // pred_fallthru
    _

</llo_original>
